<compile_context>
chip_gen: v7x
topology: tpu7x:2x2x1
jax: 0.10.0
libtpu: 0.0.40
codegen_flags: <defaults>
</compile_context>

<pallas_src>
import jax
import jax.numpy as jnp
from jax import lax
from jax.experimental import pallas as pl
from jax.experimental.pallas import tpu as pltpu


def _nearest_embed_kernel(x_ref, w_ref, wt_ref, w2h_ref, res_ref, idx_ref):
    # x_ref  : (1, D, TM)  input tile (channels on sublanes, spatial on lanes)
    # w_ref  : (D, Kp)     codebook (compute dtype)
    # wt_ref : (Kp, D)     codebook transposed (precomputed in wrapper, compute dtype)
    # w2h_ref: (Kp, 1)     0.5 * per-code squared L2 norm, f32 (+inf on padded codes)
    # res_ref: (1, D, TM)  quantized vectors (NCHW tile layout, input dtype)
    # idx_ref: (1, 1, TM)  argmin code indices, int32, lane-dense
    wt = wt_ref[...]                                   # (Kp, D)
    w = w_ref[...]                                     # (D, Kp)
    xt = x_ref[0].astype(wt.dtype)                     # (D, TM); no-op when dtypes match
    kp = wt.shape[0]

    # adj[k, t] = <e_k, x_t> - 0.5*||e_k||^2 ; argmax_k adj == argmin_k ||x_t - e_k||^2.
    scores = jnp.dot(wt, xt, preferred_element_type=jnp.float32)     # (Kp, TM) f32
    adj = scores - w2h_ref[...]                                      # (Kp, TM) one subtract

    dmax = jnp.max(adj, axis=0, keepdims=True)                       # (1, TM)
    k_iota = lax.broadcasted_iota(jnp.int32, adj.shape, 0)           # (Kp, TM) int32

    # First-occurrence argmax along the codebook (sublane) axis, all in int32.
    idx_i = jnp.min(jnp.where(adj >= dmax, k_iota, kp),
                    axis=0, keepdims=True)                           # (1, TM) int32

    # Gather codebook columns via one-hot matmul (MXU-friendly, no dynamic gather).
    onehot = (k_iota == idx_i).astype(w.dtype)                       # (Kp, TM)
    quant = jnp.dot(w, onehot, preferred_element_type=jnp.float32)   # (D, TM)

    res_ref[0] = quant.astype(res_ref.dtype)
    idx_ref[0] = idx_i


def _nearest_embed_lookup(x3, weight, *, tile_m=1024):
    """x3: (B, D, S); weight: (D, K) -> (result (B, D, S) x.dtype, idx (B, 1, S) i32)."""
    B, D, S = x3.shape
    K = weight.shape[1]

    out_dtype = x3.dtype
    compute_dtype = jnp.bfloat16 if x3.dtype == jnp.bfloat16 else jnp.float32

    w_f32 = weight.astype(jnp.float32)
    w2h = 0.5 * jnp.sum(w_f32 * w_f32, axis=0)                       # (K,)
    # Pad the codebook axis: to 128 lanes when K is already large, else to 8 sublanes.
    k_pad = (-K) % 128 if K >= 128 else (-K) % 8
    if k_pad:
        # Padded codes get +inf half-norm so they can never win the argmax.
        w_f32 = jnp.concatenate([w_f32, jnp.zeros((D, k_pad), jnp.float32)], axis=1)
        w2h = jnp.concatenate([w2h, jnp.full((k_pad,), jnp.inf, jnp.float32)])
    kp = K + k_pad
    w_c = w_f32.astype(compute_dtype)                                # (D, Kp)
    wt_c = w_f32.T.astype(compute_dtype)                             # (Kp, D) one-time transpose
    w2hc = w2h[:, None]                                              # (Kp, 1) f32

    # Spatial tile: lane-aligned (multiple of 128) so output stores are unmasked.
    if S >= 128:
        tm = max(128, min(tile_m, (S // 128) * 128))
    else:
        tm = S
    # v7x megacore: keep >= 2 parallel grid steps when possible (2 TensorCores per chip).
    if B == 1 and S >= 256 and pl.cdiv(S, tm) < 2:
        tm = max(128, (((S + 1) // 2) // 128) * 128)
    grid = (B, pl.cdiv(S, tm))

    # Rough resident-VMEM estimate (double-buffered I/O tiles + codebook + intermediates)
    # so v5e's 16 MiB default scoped VMEM does not block compilation.
    in_bytes = jnp.dtype(out_dtype).itemsize
    c_bytes = jnp.dtype(compute_dtype).itemsize
    est = (2 * D * tm * in_bytes          # x tiles
           + 2 * D * tm * in_bytes        # res tiles
           + 2 * tm * 4                   # idx tiles
           + 2 * 2 * D * kp * c_bytes     # w + wt (double buffered by the pipeline)
           + 2 * kp * 4                   # w2h
           + 3 * kp * tm * 4              # scores / adj / onehot intermediates
           + 2 * D * tm * 4)              # quant f32 + cast
    vmem_limit = int(min(64 * 1024 * 1024, max(32 * 1024 * 1024, 2 * est)))

    res, idx = pl.pallas_call(
        _nearest_embed_kernel,
        out_shape=(
            jax.ShapeDtypeStruct((B, D, S), out_dtype),
            jax.ShapeDtypeStruct((B, 1, S), jnp.int32),
        ),
        grid_spec=pltpu.PrefetchScalarGridSpec(
            num_scalar_prefetch=0,
            grid=grid,
            in_specs=[
                pl.BlockSpec((1, D, tm), lambda b, t: (b, 0, t)),
                pl.BlockSpec((D, kp), lambda b, t: (0, 0)),
                pl.BlockSpec((kp, D), lambda b, t: (0, 0)),
                pl.BlockSpec((kp, 1), lambda b, t: (0, 0)),
            ],
            out_specs=[
                pl.BlockSpec((1, D, tm), lambda b, t: (b, 0, t)),
                pl.BlockSpec((1, 1, tm), lambda b, t: (b, 0, t)),
            ],
        ),
        compiler_params=pltpu.CompilerParams(
            dimension_semantics=("parallel", "parallel"),
            vmem_limit_bytes=vmem_limit),
    )(x3, w_c, wt_c, w2hc)
    return res, idx


class NearestEmbedEMA:
    """JAX/Pallas port of the PyTorch NearestEmbedEMA module (forward / eval)."""

    def __init__(self, n_emb, emb_dim, decay=0.99, eps=1e-5, key=None, tile_m=1024):
        self.decay = decay
        self.eps = eps
        self.n_emb = n_emb
        self.emb_dim = emb_dim
        self.tile_m = tile_m
        if key is None:
            key = jax.random.PRNGKey(42)
        # torch.rand(emb_dim, n_emb) -> uniform [0, 1)
        self.weight = jax.random.uniform(key, (emb_dim, n_emb), dtype=jnp.float32)
        self.cluster_size = jnp.zeros((n_emb,), jnp.float32)
        self.embed_avg = self.weight.copy()

    def __call__(self, x):
        # x: (B, emb_dim, *spatial)  (NCHW for 4-D inputs)
        B, D = x.shape[0], x.shape[1]
        assert D == self.emb_dim
        spatial = x.shape[2:]
        S = 1
        for s in spatial:
            S *= s
        x3 = x.reshape(B, D, S)          # contiguous reshape: no transpose / HBM copy
        res3, idx3 = _nearest_embed_lookup(x3, self.weight, tile_m=self.tile_m)
        result = res3.reshape((B, D) + spatial)
        argmin = idx3.reshape((B,) + spatial)
        return result, argmin


def _reference_forward(x, weight):
    """Pure-JAX reference matching the PyTorch forward."""
    B, D = x.shape[0], x.shape[1]
    n_sp = x.ndim - 2
    x_expanded = x[..., None]                                            # (B, D, *sp, 1)
    emb_expanded = weight.reshape((D,) + (1,) * n_sp + (weight.shape[1],))
    dist = jnp.linalg.norm(x_expanded - emb_expanded, ord=2, axis=1)     # (B, *sp, K)
    argmin = jnp.argmin(dist, axis=-1)                                   # (B, *sp)
    result_cl = weight.T[argmin]                                         # (B, *sp, D)
    perm = (0, x.ndim - 1) + tuple(range(1, x.ndim - 1))
    result = jnp.transpose(result_cl, perm)                              # (B, D, *sp)
    return result, argmin


if __name__ == "__main__":
    key = jax.random.PRNGKey(0)
    k_x, k_w = jax.random.split(key)

    B, C, H, W = 2, 4, 16, 16
    n_emb = 32
    x = jax.random.normal(k_x, (B, C, H, W), dtype=jnp.float32)

    module = NearestEmbedEMA(n_emb=n_emb, emb_dim=C, key=k_w)

    result, argmin = module(x)
    result = jax.block_until_ready(result)
    argmin = jax.block_until_ready(argmin)

    # Validate against a pure-JAX reference of the PyTorch forward.
    ref_result, ref_argmin = _reference_forward(x, module.weight)
    assert result.shape == (B, C, H, W)
    assert argmin.shape == (B, H, W)
    assert jnp.array_equal(argmin, ref_argmin.astype(argmin.dtype))
    assert jnp.allclose(result, ref_result, atol=1e-5, rtol=1e-5)

    print("KERNEL_OK")
</pallas_src>

<mosaic_0001>
module attributes {stable_mosaic.version = 11 : i64} {
  func.func @_nearest_embed_kernel(%arg0: i32, %arg1: i32, %arg2: memref<1x4x256xf32, #tpu.memory_space<vmem>>, %arg3: memref<4x32xf32, #tpu.memory_space<vmem>>, %arg4: memref<32x4xf32, #tpu.memory_space<vmem>>, %arg5: memref<32x1xf32, #tpu.memory_space<vmem>>, %arg6: memref<1x4x256xf32, #tpu.memory_space<vmem>>, %arg7: memref<1x1x256xi32, #tpu.memory_space<vmem>>) attributes {dimension_semantics = [#tpu.dimension_semantics<parallel>, #tpu.dimension_semantics<parallel>], iteration_bounds = array<i64: 2, 1>, scalar_prefetch = 0 : i64, scratch_operands = 0 : i64, tpu.core_type = #tpu.core_type<tc>, window_params = [{transform_indices = @transform_0, window_bounds = array<i64: 1, 4, 256>}, {pipeline_mode = #tpu.pipeline_mode<synchronous>, transform_indices = @transform_1, window_bounds = array<i64: 4, 32>}, {pipeline_mode = #tpu.pipeline_mode<synchronous>, transform_indices = @transform_2, window_bounds = array<i64: 32, 4>}, {pipeline_mode = #tpu.pipeline_mode<synchronous>, transform_indices = @transform_3, window_bounds = array<i64: 32, 1>}, {transform_indices = @transform_4, window_bounds = array<i64: 1, 4, 256>}, {transform_indices = @transform_5, window_bounds = array<i64: 1, 1, 256>}]} {
    %c0 = arith.constant 0 : index
    %c0_0 = arith.constant 0 : index
    %0 = vector.load %arg4[%c0, %c0_0] : memref<32x4xf32, #tpu.memory_space<vmem>>, vector<32x4xf32>
    %c0_1 = arith.constant 0 : index
    %c0_2 = arith.constant 0 : index
    %1 = vector.load %arg3[%c0_1, %c0_2] : memref<4x32xf32, #tpu.memory_space<vmem>>, vector<4x32xf32>
    %c0_3 = arith.constant 0 : index
    %c0_4 = arith.constant 0 : index
    %c0_5 = arith.constant 0 : index
    %2 = vector.load %arg2[%c0_3, %c0_4, %c0_5] : memref<1x4x256xf32, #tpu.memory_space<vmem>>, vector<1x4x256xf32>
    %3 = vector.shape_cast %2 : vector<1x4x256xf32> to vector<4x256xf32>
    %cst = arith.constant dense<0.000000e+00> : vector<32x256xf32>
    %4 = tpu.matmul %0, %3, %cst {dimension_numbers = #tpu.dot_dimension_numbers<[1], [0], [0], [1], [0, 0, 1, 1], [], []>} : vector<32x4xf32>, vector<4x256xf32>, vector<32x256xf32> -> vector<32x256xf32>
    %c0_6 = arith.constant 0 : index
    %c0_7 = arith.constant 0 : index
    %5 = vector.load %arg5[%c0_6, %c0_7] : memref<32x1xf32, #tpu.memory_space<vmem>>, vector<32x1xf32>
    %6 = vector.broadcast %5 : vector<32x1xf32> to vector<32x256xf32>
    %7 = arith.subf %4, %6 : vector<32x256xf32>
    %cst_8 = arith.constant dense<0xFF800000> : vector<256xf32>
    %8 = vector.multi_reduction <maximumf>, %7, %cst_8 [0] : vector<32x256xf32> to vector<256xf32>
    %9 = vector.shape_cast %8 : vector<256xf32> to vector<1x256xf32>
    %10 = tpu.iota {dimensions = array<i32: 0>} : vector<32x256xi32>
    %11 = vector.broadcast %9 : vector<1x256xf32> to vector<32x256xf32>
    %12 = arith.cmpf oge, %7, %11 : vector<32x256xf32>
    %c32_i32 = arith.constant 32 : i32
    %13 = vector.broadcast %c32_i32 : i32 to vector<32x256xi32>
    %14 = arith.select %12, %10, %13 : vector<32x256xi1>, vector<32x256xi32>
    %cst_9 = arith.constant dense<2147483647> : vector<256xi32>
    %15 = vector.multi_reduction <minsi>, %14, %cst_9 [0] : vector<32x256xi32> to vector<256xi32>
    %16 = vector.shape_cast %15 : vector<256xi32> to vector<1x256xi32>
    %17 = vector.broadcast %16 : vector<1x256xi32> to vector<32x256xi32>
    %18 = arith.cmpi eq, %10, %17 : vector<32x256xi32>
    %19 = arith.extui %18 : vector<32x256xi1> to vector<32x256xi32>
    %20 = arith.sitofp %19 : vector<32x256xi32> to vector<32x256xf32>
    %cst_10 = arith.constant dense<0.000000e+00> : vector<4x256xf32>
    %21 = tpu.matmul %1, %20, %cst_10 {dimension_numbers = #tpu.dot_dimension_numbers<[1], [0], [0], [1], [0, 0, 1, 1], [], []>} : vector<4x32xf32>, vector<32x256xf32>, vector<4x256xf32> -> vector<4x256xf32>
    %c0_11 = arith.constant 0 : index
    %c0_12 = arith.constant 0 : index
    %c0_13 = arith.constant 0 : index
    %22 = vector.load %arg6[%c0_11, %c0_12, %c0_13] : memref<1x4x256xf32, #tpu.memory_space<vmem>>, vector<1x4x256xf32>
    %23 = vector.shape_cast %22 : vector<1x4x256xf32> to vector<4x256xf32>
    %24 = vector.shape_cast %21 : vector<4x256xf32> to vector<1x4x256xf32>
    tpu.vector_store %arg6[%c0_11, %c0_12, %c0_13], %24 {strides = array<i32>} : memref<1x4x256xf32, #tpu.memory_space<vmem>>, vector<1x4x256xf32>,
    %c0_14 = arith.constant 0 : index
    %c0_15 = arith.constant 0 : index
    %c0_16 = arith.constant 0 : index
    %25 = vector.load %arg7[%c0_14, %c0_15, %c0_16] : memref<1x1x256xi32, #tpu.memory_space<vmem>>, vector<1x1x256xi32>
    %26 = vector.shape_cast %25 : vector<1x1x256xi32> to vector<1x256xi32>
    %27 = vector.shape_cast %16 : vector<1x256xi32> to vector<1x1x256xi32>
    tpu.vector_store %arg7[%c0_14, %c0_15, %c0_16], %27 {strides = array<i32>} : memref<1x1x256xi32, #tpu.memory_space<vmem>>, vector<1x1x256xi32>,
    return
  }
  func.func @transform_0(%arg0: i32, %arg1: i32) -> (i32, i32, i32) {
    %c0_i32 = arith.constant 0 : i32
    %c0_i32_0 = arith.constant 0 : i32
    return %arg0, %c0_i32, %arg1 : i32, i32, i32
  }
  func.func @transform_1(%arg0: i32, %arg1: i32) -> (i32, i32) {
    %c0_i32 = arith.constant 0 : i32
    %c0_i32_0 = arith.constant 0 : i32
    %c0_i32_1 = arith.constant 0 : i32
    return %c0_i32, %c0_i32_0 : i32, i32
  }
  func.func @transform_2(%arg0: i32, %arg1: i32) -> (i32, i32) {
    %c0_i32 = arith.constant 0 : i32
    %c0_i32_0 = arith.constant 0 : i32
    %c0_i32_1 = arith.constant 0 : i32
    return %c0_i32, %c0_i32_0 : i32, i32
  }
  func.func @transform_3(%arg0: i32, %arg1: i32) -> (i32, i32) {
    %c0_i32 = arith.constant 0 : i32
    %c0_i32_0 = arith.constant 0 : i32
    %c0_i32_1 = arith.constant 0 : i32
    return %c0_i32, %c0_i32_0 : i32, i32
  }
  func.func @transform_4(%arg0: i32, %arg1: i32) -> (i32, i32, i32) {
    %c0_i32 = arith.constant 0 : i32
    %c0_i32_0 = arith.constant 0 : i32
    return %arg0, %c0_i32, %arg1 : i32, i32, i32
  }
  func.func @transform_5(%arg0: i32, %arg1: i32) -> (i32, i32, i32) {
    %c0_i32 = arith.constant 0 : i32
    %c0_i32_0 = arith.constant 0 : i32
    return %arg0, %c0_i32, %arg1 : i32, i32, i32
  }
}

</mosaic_0001>

<llo_original>
// kernel: tpu_custom_call.1
$region0: #{tpu_custom_call.1}
  #allocation0 [shape = 'u32[]', space=smem, size = 0x4, offset = 0x4, fixed_abs, tag = 'smem constant byte address 0x4 - core index']
  #allocation1 [shape = 'u32[144,128]{1,0:T(1,128)}', space=vmem, size = 0x12000, scoped, tag = 'internal scratch']
  %s0 = inlined_call_operand.vmem [shape: f32[2,4,256], index: 0, kind: input, shape index: {}]
  %s1 = inlined_call_operand.vmem [shape: f32[4,32], index: 1, kind: input, shape index: {}]
  %s2 = inlined_call_operand.vmem [shape: f32[32,4], index: 2, kind: input, shape index: {}]
  %s3 = inlined_call_operand.vmem [shape: f32[32,1], index: 3, kind: input, shape index: {}]
  %s4 = inlined_call_operand.hbm [shape: f32[2,4,256], index: 4, kind: output, shape index: {0}]
  %s5 = inlined_call_operand.hbm [shape: s32[2,1,256], index: 5, kind: output, shape index: {1}]
  %6 = xla_tuple %s4, %s5
  %s7 = sld [smem:[#allocation0]]
  $region57: #{tpu_custom_call.1} parent=0
    _
  %s9 = ssub.s32 1, %s7
  %s10 = scalar_select 0, %s9, %s7
  $region1: #{tpu_custom_call.1} parent=0
    #allocation2 [shape = 'u8[8192]{0}', space=vmem, size = 0x2000, scoped, tag = 'output window, operand 0']
    #allocation3 [shape = 's32[2]{0}', space=sflag, size = 0x8, scoped, tag = 'scoped memory for tpu_custom_call.1']
    #allocation4 [shape = 'u8[2048]{0}', space=vmem, size = 0x800, scoped, tag = 'output window, operand 1']
    #allocation5 [shape = 's32[2]{0}', space=sflag, size = 0x8, scoped, tag = 'scoped memory for tpu_custom_call.1']
    %11 = vsyncpa [#allocation3], 0
    %s12 = scalar_lea.sflag [#allocation3], 1
    %13 = vsyncpa %s12, 0
    %14 = vsyncpa [#allocation5], 0
    %s15 = scalar_lea.sflag [#allocation5], 1
    %16 = vsyncpa %s15, 0
    loop: start=0, step=1, limit=4
    $region2: #{tpu_custom_call.1} parent=1 // loop_pre_header
      _
    $region3: #{tpu_custom_call.1} parent=1 // loop_header
      %s18 = sphi 0, %s22
      %p19 = scmp.ge.s32.totalorder %s18, 4
      %s25 = sphi 0, %s37
      %s26 = sphi 0, %s33
      %s27 = sphi 0, %s25
      %s28 = sphi 0, %s26
      %s29 = sphi 0, %s27
      %s30 = sphi 0, %s28
      %s42 = sphi 0, %s44
      %s45 = sphi 0, %s42
      %s46 = sphi 0, %s45
      %s62 = sphi 0, %s46
      %s66 = sphi 0, %s66
      %s68 = sphi 0, %s66
      %s69 = sphi 0, %s68
      %s83 = sphi 0, %s69
      %s87 = sphi 0, %s87
      %s89 = sphi 0, %s87
      %s90 = sphi 0, %s89
      %s104 = sphi 0, %s90
      %s108 = sphi 0, %s108
      %s110 = sphi 0, %s108
      %s111 = sphi 0, %s110
      %s125 = sphi 0, %s111
      %s133 = sphi 0, %s135
      %s136 = sphi 0, %s133
      %s137 = sphi 0, %s136
      %s153 = sphi 0, %s137
      %s161 = sphi 0, %s163
      %s164 = sphi 0, %s161
      %s165 = sphi 0, %s164
      %s181 = sphi 0, %s165
    $region4: #{tpu_custom_call.1} parent=1 // loop_header_branch
      %21 = sbr.rel (%p19) target = $region8
    $region5: #{tpu_custom_call.1} parent=1 // loop_body
      %s23 = ssub.s32 %s18, 1
      %s24 = ssub.s32 %s18, 2
      %s31 = sadd.s32 1, %s26
      %p32 = scmp.ge.s32.totalorder %s31, 1
      %s33 = scalar_select %p32, 0, %s31
      %s34 = sadd.s32 1, %s25
      %s35 = scalar_select %p32, %s34, %s25
      %p36 = scmp.ge.s32.totalorder %s35, 2
      %s37 = scalar_select %p36, 0, %s35
      %s38 = ssub.s32 %s25, %s37
      %s39 = ssub.s32 %s26, %s33
      %s40 = sor.u32 %s38, %s39
      %p41 = scmp.eq.s32.totalorder %s40, 0
      %s43 = sadd.s32 %s42, 1
      %s44 = scalar_select %p41, %s42, %s43
      %p47 = pneg %p41
      %p48 = scmp.eq.s32.totalorder %s18, 1
      %p49 = por %p47, %p48
      %p50 = scmp.ne.s32.totalorder %s42, %s45
      %p51 = scmp.eq.s32.totalorder %s18, 0
      %p52 = por %p50, %p51
      %p53 = scmp.ne.s32.totalorder %s42, %s45
      %p54 = scmp.eq.s32.totalorder %s23, 1
      %p55 = por %p53, %p54
      %p56 = scmp.ne.s32.totalorder %s45, %s46
      %p57 = scmp.eq.s32.totalorder %s23, 0
      %p58 = por %p56, %p57
      %p59 = scmp.ne.s32.totalorder %s45, %s46
      %p60 = scmp.eq.s32.totalorder %s24, 1
      %p61 = por %p59, %p60
      %p63 = scmp.ne.s32.totalorder %s46, %s62
      %p64 = scmp.eq.s32.totalorder %s24, 0
      %p65 = por %p63, %p64
      %s67 = sadd.s32 %s66, 1
      %p70 = scmp.eq.s32.totalorder %s18, 1
      %p71 = scmp.ne.s32.totalorder %s66, %s68
      %p72 = scmp.eq.s32.totalorder %s18, 0
      %p73 = por %p71, %p72
      %p74 = scmp.ne.s32.totalorder %s66, %s68
      %p75 = scmp.eq.s32.totalorder %s23, 1
      %p76 = por %p74, %p75
      %p77 = scmp.ne.s32.totalorder %s68, %s69
      %p78 = scmp.eq.s32.totalorder %s23, 0
      %p79 = por %p77, %p78
      %p80 = scmp.ne.s32.totalorder %s68, %s69
      %p81 = scmp.eq.s32.totalorder %s24, 1
      %p82 = por %p80, %p81
      %p84 = scmp.ne.s32.totalorder %s69, %s83
      %p85 = scmp.eq.s32.totalorder %s24, 0
      %p86 = por %p84, %p85
      %s88 = sadd.s32 %s87, 1
      %p91 = scmp.eq.s32.totalorder %s18, 1
      %p92 = scmp.ne.s32.totalorder %s87, %s89
      %p93 = scmp.eq.s32.totalorder %s18, 0
      %p94 = por %p92, %p93
      %p95 = scmp.ne.s32.totalorder %s87, %s89
      %p96 = scmp.eq.s32.totalorder %s23, 1
      %p97 = por %p95, %p96
      %p98 = scmp.ne.s32.totalorder %s89, %s90
      %p99 = scmp.eq.s32.totalorder %s23, 0
      %p100 = por %p98, %p99
      %p101 = scmp.ne.s32.totalorder %s89, %s90
      %p102 = scmp.eq.s32.totalorder %s24, 1
      %p103 = por %p101, %p102
      %p105 = scmp.ne.s32.totalorder %s90, %s104
      %p106 = scmp.eq.s32.totalorder %s24, 0
      %p107 = por %p105, %p106
      %s109 = sadd.s32 %s108, 1
      %p112 = scmp.eq.s32.totalorder %s18, 1
      %p113 = scmp.ne.s32.totalorder %s108, %s110
      %p114 = scmp.eq.s32.totalorder %s18, 0
      %p115 = por %p113, %p114
      %p116 = scmp.ne.s32.totalorder %s108, %s110
      %p117 = scmp.eq.s32.totalorder %s23, 1
      %p118 = por %p116, %p117
      %p119 = scmp.ne.s32.totalorder %s110, %s111
      %p120 = scmp.eq.s32.totalorder %s23, 0
      %p121 = por %p119, %p120
      %p122 = scmp.ne.s32.totalorder %s110, %s111
      %p123 = scmp.eq.s32.totalorder %s24, 1
      %p124 = por %p122, %p123
      %p126 = scmp.ne.s32.totalorder %s111, %s125
      %p127 = scmp.eq.s32.totalorder %s24, 0
      %p128 = por %p126, %p127
      %s129 = ssub.s32 %s25, %s37
      %s130 = ssub.s32 %s26, %s33
      %s131 = sor.u32 %s129, %s130
      %p132 = scmp.eq.s32.totalorder %s131, 0
      %s134 = sadd.s32 %s133, 1
      %s135 = scalar_select %p132, %s133, %s134
      %p138 = pneg %p132
      %p139 = scmp.eq.s32.totalorder %s18, 1
      %p140 = por %p138, %p139
      %p141 = scmp.ne.s32.totalorder %s133, %s136
      %p142 = scmp.eq.s32.totalorder %s18, 0
      %p143 = por %p141, %p142
      %p144 = scmp.ne.s32.totalorder %s133, %s136
      %p145 = scmp.eq.s32.totalorder %s23, 1
      %p146 = por %p144, %p145
      %p147 = scmp.ne.s32.totalorder %s136, %s137
      %p148 = scmp.eq.s32.totalorder %s23, 0
      %p149 = por %p147, %p148
      %p150 = scmp.ne.s32.totalorder %s136, %s137
      %p151 = scmp.eq.s32.totalorder %s24, 1
      %p152 = por %p150, %p151
      %p154 = scmp.ne.s32.totalorder %s137, %s153
      %p155 = scmp.eq.s32.totalorder %s24, 0
      %p156 = por %p154, %p155
      %s157 = ssub.s32 %s25, %s37
      %s158 = ssub.s32 %s26, %s33
      %s159 = sor.u32 %s157, %s158
      %p160 = scmp.eq.s32.totalorder %s159, 0
      %s162 = sadd.s32 %s161, 1
      %s163 = scalar_select %p160, %s161, %s162
      %p166 = pneg %p160
      %p167 = scmp.eq.s32.totalorder %s18, 1
      %p168 = por %p166, %p167
      %p169 = scmp.ne.s32.totalorder %s161, %s164
      %p170 = scmp.eq.s32.totalorder %s18, 0
      %p171 = por %p169, %p170
      %p172 = scmp.ne.s32.totalorder %s161, %s164
      %p173 = scmp.eq.s32.totalorder %s23, 1
      %p174 = por %p172, %p173
      %p175 = scmp.ne.s32.totalorder %s164, %s165
      %p176 = scmp.eq.s32.totalorder %s23, 0
      %p177 = por %p175, %p176
      %p178 = scmp.ne.s32.totalorder %s164, %s165
      %p179 = scmp.eq.s32.totalorder %s24, 1
      %p180 = por %p178, %p179
      %p182 = scmp.ne.s32.totalorder %s165, %s181
      %p183 = scmp.eq.s32.totalorder %s24, 0
      %p184 = por %p182, %p183
      %p185 = scmp.le.s32.totalorder 1, %s18
      %p186 = scmp.lt.s32.totalorder %s18, 3
      %p187 = pnand %p185, %p186
      %p188 = pneg %p187
      // Predicated region
      $region9: #{tpu_custom_call.1} parent=5 // pred_check
        _
      $region10: #{tpu_custom_call.1} parent=5 // pred_check_branch
        %190 = sbr.rel (%p187) target = $region12
      $region11: #{tpu_custom_call.1} parent=5 // pred_region
        %s191 = ssub.s32 %s18, 1
        // Predicated region
        $region13: #{tpu_custom_call.1} parent=11 // pred_check
          %p192 = pneg %p79
        $region14: #{tpu_custom_call.1} parent=11 // pred_check_branch
          %194 = sbr.rel (%p192) target = $region16
        $region15: #{tpu_custom_call.1} parent=11 // pred_region
          _
        $region16: #{tpu_custom_call.1} parent=11 // pred_fallthru
          _
        // Predicated region
        $region17: #{tpu_custom_call.1} parent=11 // pred_check
          %p195 = pneg %p100
        $region18: #{tpu_custom_call.1} parent=11 // pred_check_branch
          %197 = sbr.rel (%p195) target = $region20
        $region19: #{tpu_custom_call.1} parent=11 // pred_region
          _
        $region20: #{tpu_custom_call.1} parent=11 // pred_fallthru
          _
        // Predicated region
        $region21: #{tpu_custom_call.1} parent=11 // pred_check
          %p198 = pneg %p121
        $region22: #{tpu_custom_call.1} parent=11 // pred_check_branch
          %200 = sbr.rel (%p198) target = $region24
        $region23: #{tpu_custom_call.1} parent=11 // pred_region
          _
        $region24: #{tpu_custom_call.1} parent=11 // pred_fallthru
          _
      $region12: #{tpu_custom_call.1} parent=5 // pred_fallthru
        _
      %p201 = scmp.lt.s32.totalorder %s18, 2
      // Predicated region
      $region25: #{tpu_custom_call.1} parent=5 // pred_check
        %p202 = pneg %p201
      $region26: #{tpu_custom_call.1} parent=5 // pred_check_branch
        %204 = sbr.rel (%p202) target = $region28
      $region27: #{tpu_custom_call.1} parent=5 // pred_region
        // Predicated region
        $region29: #{tpu_custom_call.1} parent=27 // pred_check
          %p205 = pneg %p52
        $region30: #{tpu_custom_call.1} parent=27 // pred_check_branch
          %207 = sbr.rel (%p205) target = $region32
        $region31: #{tpu_custom_call.1} parent=27 // pred_region
          %s208 = smul.u32 2, %s26
          %p209 = scmp.lt.s32.totalorder %s25, 1
          %s210 = scalar_select %p209, %s25, 1
          %p211 = scmp.lt.s32.totalorder %s208, 1
          %s212 = scalar_select %p211, %s208, 1
          %s213 = smul.addr %s210, 2
          %s214 = sadd.s32 %s212, %s213
          %s215 = smul.addr %s214, 4
          %s216 = scalar_lea.vmem %s0, %s215
          %s217 = smul.u32 2, %s26
        $region32: #{tpu_custom_call.1} parent=27 // pred_fallthru
          _
      $region28: #{tpu_custom_call.1} parent=5 // pred_fallthru
        _
      %p218 = scmp.le.s32.totalorder 1, %s18
      %p219 = scmp.lt.s32.totalorder %s18, 3
      %p220 = pnand %p218, %p219
      %p221 = pneg %p220
      // Predicated region
      $region33: #{tpu_custom_call.1} parent=5 // pred_check
        _
      $region34: #{tpu_custom_call.1} parent=5 // pred_check_branch
        %223 = sbr.rel (%p220) target = $region36
      $region35: #{tpu_custom_call.1} parent=5 // pred_region
        %s224 = ssub.s32 %s18, 1
        %s225 = smul.u32 2, %s28
        %p226 = scmp.lt.s32.totalorder %s27, 1
        %s227 = scalar_select %p226, %s27, 1
        %p228 = scmp.lt.s32.totalorder %s225, 1
        %s229 = scalar_select %p228, %s225, 1
        %s230 = smul.addr %s227, 2
        %s231 = sadd.s32 %s229, %s230
        %s232 = smul.addr %s231, 4
        %s233 = scalar_lea.vmem %s0, %s232
        %p234 = pneg %p58
        %p235 = pneg %p55
        %p236 = pneg %p79
        %p237 = pneg %p76
        %p238 = pneg %p100
        %p239 = pneg %p97
        %p240 = pneg %p121
        %p241 = pneg %p118
        %p242 = pneg %p149
        %p243 = pneg %p146
        %s244 = sand.u32 %s136, 1
        %s245 = scalar_lea.sflag [#allocation3], %s244
        %s246 = sand.u32 %s136, 1
        %s247 = smul.addr %s246, 8
        %s248 = scalar_lea.vmem [#allocation2], %s247
        %p249 = pneg %p177
        %p250 = pneg %p174
        %s251 = sand.u32 %s164, 1
        %s252 = scalar_lea.sflag [#allocation5], %s251
        %s253 = sand.u32 %s164, 1
        %s254 = smul.addr %s253, 2
        %s255 = scalar_lea.vmem [#allocation4], %s254
        %s256 = smul.u32 2, %s28
        %p257 = scmp.lt.s32.totalorder %s27, 1
        %s258 = scalar_select %p257, %s27, 1
        %p259 = scmp.lt.s32.totalorder %s256, 1
        %s260 = scalar_select %p259, %s256, 1
        %s261 = smul.addr %s258, 2
        %s262 = sadd.s32 %s260, %s261
        %s263 = smul.addr %s262, 4
        %s264 = scalar_lea.vmem %s0, %s263
        %s265 = smul.u32 2, %s28
        %s266 = smul.u32 2, %s28
        %s267 = smul.u32 2, %s28
        %v268 = vld [vmem:[%s2] sm:$0xff]
        %v269 = vld [vmem:[%s2 + $0x8] sm:$0xff]
        %v270 = vld [vmem:[%s2 + $0x10] sm:$0xff]
        %v271 = vld [vmem:[%s2 + $0x18] sm:$0xff]
        %v272 = vld [vmem:[%s1] sm:$0xf]
        %v273 = vld [vmem:[%s264] sm:$0xff]
        %v275 = vcombine.high %v273, %v273
        %vm276 = vcmask 31744
        %v278 = vsel %vm276, %v268, 0
        %v281 = vsel %vm276, %v269, 0
        %v284 = vsel %vm276, %v270, 0
        %v287 = vsel %vm276, %v271, 0
        %vm289 = vcmask 1043456
        %v290 = vsel %vm289, %v273, 0
        %v292 = vsel %vm289, %v275, 0
        %294 = vmatprep.subr.mxu0 %v292
        %295 = vmatpush1.msra.mxu0 %v290
        %296 = vmatprep.subr.mxu0 0.0
        %297 = vmatpush1.msra.mxu0 0.0
        %298 = vmatprep.subr.mxu0 0.0
        %299 = vmatpush1.msra.mxu0 0.0
        %300 = vmatprep.subr.mxu0 0.0
        %301 = vmatpush1.msra.mxu0 0.0
        %302 = vmatprep.subr.mxu0 0.0
        %303 = vmatpush1.msra.mxu0 0.0
        %304 = vmatprep.subr.mxu0 0.0
        %305 = vmatpush1.msra.mxu0 0.0
        %306 = vmatprep.subr.mxu0 0.0
        %307 = vmatpush1.msra.mxu0 0.0
        %308 = vmatprep.subr.mxu0 0.0
        %309 = vmatpush1.msra.mxu0 0.0
        %310 = vmatprep.subr.mxu0 0.0
        %311 = vmatpush1.msra.mxu0 0.0
        %312 = vmatprep.subr.mxu0 0.0
        %313 = vmatpush1.msra.mxu0 0.0
        %314 = vmatprep.subr.mxu0 0.0
        %315 = vmatpush1.msra.mxu0 0.0
        %316 = vmatprep.subr.mxu0 0.0
        %317 = vmatpush1.msra.mxu0 0.0
        %318 = vmatprep.subr.mxu0 0.0
        %319 = vmatpush1.msra.mxu0 0.0
        %320 = vmatprep.subr.mxu0 0.0
        %321 = vmatpush1.msra.mxu0 0.0
        %322 = vmatprep.subr.mxu0 0.0
        %323 = vmatpush1.msra.mxu0 0.0
        %324 = vmatprep.subr.mxu0 0.0
        %325 = vmatpush1.msra.mxu0 0.0
        %326 = vmatprep.subr.mxu0 0.0
        %327 = vmatpush1.msra.mxu0 0.0
        %328 = vmatprep.subr.mxu0 0.0
        %329 = vmatpush1.msra.mxu0 0.0
        %330 = vmatprep.subr.mxu0 0.0
        %331 = vmatpush1.msra.mxu0 0.0
        %332 = vmatprep.subr.mxu0 0.0
        %333 = vmatpush1.msra.mxu0 0.0
        %334 = vmatprep.subr.mxu0 0.0
        %335 = vmatpush1.msra.mxu0 0.0
        %336 = vmatprep.subr.mxu0 0.0
        %337 = vmatpush1.msra.mxu0 0.0
        %338 = vmatprep.subr.mxu0 0.0
        %339 = vmatpush1.msra.mxu0 0.0
        %340 = vmatprep.subr.mxu0 0.0
        %341 = vmatpush1.msra.mxu0 0.0
        %342 = vmatprep.subr.mxu0 0.0
        %343 = vmatpush1.msra.mxu0 0.0
        %344 = vmatprep.subr.mxu0 0.0
        %345 = vmatpush1.msra.mxu0 0.0
        %346 = vmatprep.subr.mxu0 0.0
        %347 = vmatpush1.msra.mxu0 0.0
        %348 = vmatprep.subr.mxu0 0.0
        %349 = vmatpush1.msra.mxu0 0.0
        %350 = vmatprep.subr.mxu0 0.0
        %351 = vmatpush1.msra.mxu0 0.0
        %352 = vmatprep.subr.mxu0 0.0
        %353 = vmatpush1.msra.mxu0 0.0
        %354 = vmatprep.subr.mxu0 0.0
        %355 = vmatpush1.msra.mxu0 0.0
        %356 = vmatprep.subr.mxu0 0.0
        %357 = vmatpush1.msra.mxu0 0.0
        %358 = vmatprep.mubr.f32.mxu0 0.0
        %359 = vmatmul.mubr.f32.gmra.mrb[0].mxu0 %v278
        %v360 = vpop.f32.mrb[0].mxu0
        %v361 = vadd.f32 0.0, %v360
        %v362 = vpop.f32.mrb[0].mxu0
        %v363 = vadd.f32 0.0, %v362
        %364 = vmatprep.mubr.f32.mxu0 0.0
        %365 = vmatmul.mubr.f32.gmra.mrb[0].mxu0 %v281
        %v366 = vpop.f32.mrb[0].mxu0
        %v367 = vadd.f32 0.0, %v366
        %v368 = vpop.f32.mrb[0].mxu0
        %v369 = vadd.f32 0.0, %v368
        %370 = vmatprep.mubr.f32.mxu0 0.0
        %371 = vmatmul.mubr.f32.gmra.mrb[0].mxu0 %v284
        %v372 = vpop.f32.mrb[0].mxu0
        %v373 = vadd.f32 0.0, %v372
        %v374 = vpop.f32.mrb[0].mxu0
        %v375 = vadd.f32 0.0, %v374
        %376 = vmatprep.mubr.f32.mxu0 0.0
        %377 = vmatmul.mubr.f32.gmra.mrb[0].mxu0 %v287
        %v378 = vpop.f32.mrb[0].mxu0
        %v379 = vadd.f32 0.0, %v378
        %v380 = vpop.f32.mrb[0].mxu0
        %v381 = vadd.f32 0.0, %v380
        %382 = vdwg.mxu0
        %v383 = vld [vmem:[%s3] sm:$0xff]
        %v384 = vld [vmem:[%s3 + $0x8] sm:$0xff]
        %v385 = vld [vmem:[%s3 + $0x10] sm:$0xff]
        %v386 = vld [vmem:[%s3 + $0x18] sm:$0xff]
        %388 = vset.pattern.permute.xlu0 0
        %389 = vperm.xlu0 %388, %v383
        %v390 = vpop.permute.xlu0 %389
        %393 = vset.pattern.permute.xlu0 0
        %394 = vperm.xlu0 %393, %v384
        %v395 = vpop.permute.xlu0 %394
        %398 = vset.pattern.permute.xlu0 0
        %399 = vperm.xlu0 %398, %v385
        %v400 = vpop.permute.xlu0 %399
        %403 = vset.pattern.permute.xlu0 0
        %404 = vperm.xlu0 %403, %v386
        %v405 = vpop.permute.xlu0 %404
        %v407 = vsub.f32 %v361, %v390
        %v408 = vsub.f32 %v363, %v390
        %v409 = vsub.f32 %v367, %v395
        %v410 = vsub.f32 %v369, %v395
        %v411 = vsub.f32 %v373, %v400
        %v412 = vsub.f32 %v375, %v400
        %v413 = vsub.f32 %v379, %v405
        %v414 = vsub.f32 %v381, %v405
        %v415 = vmax.f32 %v407, %v411
        %v416 = vmax.f32 %v409, %v413
        %v417 = vmax.f32 %v415, %v416
        %v418 = vrot.slane %v417, 4
        %v419 = vmax.f32 %v417, %v418
        %v420 = vrot.slane %v419, 2
        %v421 = vmax.f32 %v419, %v420
        %v422 = vrot.slane %v421, 1
        %v423 = vmax.f32 %v421, %v422
        %v424 = vmax.f32 %v408, %v412
        %v425 = vmax.f32 %v410, %v414
        %v426 = vmax.f32 %v424, %v425
        %v427 = vrot.slane %v426, 4
        %v428 = vmax.f32 %v426, %v427
        %v429 = vrot.slane %v428, 2
        %v430 = vmax.f32 %v428, %v429
        %v431 = vrot.slane %v430, 1
        %v432 = vmax.f32 %v430, %v431
        %v433 = vlaneseq
        %v434 = vshrl.u32 %v433, 7
        %v435 = vadd.s32 %v434, 8
        %v436 = vadd.s32 %v434, 16
        %v437 = vadd.s32 %v434, 24
        %vm438 = vcmp.ge.f32.partialorder %v407, %v423
        %vm439 = vcmp.ge.f32.partialorder %v408, %v432
        %vm440 = vcmp.ge.f32.partialorder %v409, %v423
        %vm441 = vcmp.ge.f32.partialorder %v410, %v432
        %vm442 = vcmp.ge.f32.partialorder %v411, %v423
        %vm443 = vcmp.ge.f32.partialorder %v412, %v432
        %vm444 = vcmp.ge.f32.partialorder %v413, %v423
        %vm445 = vcmp.ge.f32.partialorder %v414, %v432
        %v446 = vsel %vm438, %v434, 32
        %v447 = vsel %vm439, %v434, 32
        %v448 = vsel %vm440, %v435, 32
        %v449 = vsel %vm441, %v435, 32
        %v450 = vsel %vm442, %v436, 32
        %v451 = vsel %vm443, %v436, 32
        %v452 = vsel %vm444, %v437, 32
        %v453 = vsel %vm445, %v437, 32
        %vm454 = vcmp.lt.s32.totalorder %v446, %v450
        %v455 = vsel %vm454, %v446, %v450
        %vm456 = vcmp.lt.s32.totalorder %v448, %v452
        %v457 = vsel %vm456, %v448, %v452
        %vm458 = vcmp.lt.s32.totalorder %v455, %v457
        %v459 = vsel %vm458, %v455, %v457
        %v460 = vrot.slane %v459, 4
        %vm461 = vcmp.lt.s32.totalorder %v459, %v460
        %v462 = vsel %vm461, %v459, %v460
        %v463 = vrot.slane %v462, 2
        %vm464 = vcmp.lt.s32.totalorder %v462, %v463
        %v465 = vsel %vm464, %v462, %v463
        %v466 = vrot.slane %v465, 1
        %vm467 = vcmp.lt.s32.totalorder %v465, %v466
        %v468 = vsel %vm467, %v465, %v466
        %vm469 = vcmp.lt.s32.totalorder %v447, %v451
        %v470 = vsel %vm469, %v447, %v451
        %vm471 = vcmp.lt.s32.totalorder %v449, %v453
        %v472 = vsel %vm471, %v449, %v453
        %vm473 = vcmp.lt.s32.totalorder %v470, %v472
        %v474 = vsel %vm473, %v470, %v472
        %v475 = vrot.slane %v474, 4
        %vm476 = vcmp.lt.s32.totalorder %v474, %v475
        %v477 = vsel %vm476, %v474, %v475
        %v478 = vrot.slane %v477, 2
        %vm479 = vcmp.lt.s32.totalorder %v477, %v478
        %v480 = vsel %vm479, %v477, %v478
        %v481 = vrot.slane %v480, 1
        %vm482 = vcmp.lt.s32.totalorder %v480, %v481
        %v483 = vsel %vm482, %v480, %v481
        %vm484 = vcmp.eq.s32.totalorder %v434, %v468
        %vm485 = vcmp.eq.s32.totalorder %v434, %v483
        %vm486 = vcmp.eq.s32.totalorder %v435, %v468
        %vm487 = vcmp.eq.s32.totalorder %v435, %v483
        %vm488 = vcmp.eq.s32.totalorder %v436, %v468
        %vm489 = vcmp.eq.s32.totalorder %v436, %v483
        %vm490 = vcmp.eq.s32.totalorder %v437, %v468
        %vm491 = vcmp.eq.s32.totalorder %v437, %v483
        %v492 = vsel %vm484, 1, 0
        %v493 = vsel %vm485, 1, 0
        %v494 = vsel %vm486, 1, 0
        %v495 = vsel %vm487, 1, 0
        %v496 = vsel %vm488, 1, 0
        %v497 = vsel %vm489, 1, 0
        %v498 = vsel %vm490, 1, 0
        %v499 = vsel %vm491, 1, 0
        %v500 = vcvt.s32.f32 %v492
        %v501 = vcvt.s32.f32 %v493
        %v502 = vcvt.s32.f32 %v494
        %v503 = vcvt.s32.f32 %v495
        %v504 = vcvt.s32.f32 %v496
        %v505 = vcvt.s32.f32 %v497
        %v506 = vcvt.s32.f32 %v498
        %v507 = vcvt.s32.f32 %v499
        %vm508 = vcmask 261120
        %v510 = vsel %vm508, %v272, 0
        %512 = vmatprep.subr.mxu0 %v501
        %513 = vmatpush1.msra.mxu0 %v500
        %514 = vmatprep.subr.mxu0 %v503
        %515 = vmatpush1.msra.mxu0 %v502
        %516 = vmatprep.subr.mxu0 %v505
        %517 = vmatpush1.msra.mxu0 %v504
        %518 = vmatprep.subr.mxu0 %v507
        %519 = vmatpush1.msra.mxu0 %v506
        %520 = vmatprep.subr.mxu0 0.0
        %521 = vmatpush1.msra.mxu0 0.0
        %522 = vmatprep.subr.mxu0 0.0
        %523 = vmatpush1.msra.mxu0 0.0
        %524 = vmatprep.subr.mxu0 0.0
        %525 = vmatpush1.msra.mxu0 0.0
        %526 = vmatprep.subr.mxu0 0.0
        %527 = vmatpush1.msra.mxu0 0.0
        %528 = vmatprep.subr.mxu0 0.0
        %529 = vmatpush1.msra.mxu0 0.0
        %530 = vmatprep.subr.mxu0 0.0
        %531 = vmatpush1.msra.mxu0 0.0
        %532 = vmatprep.subr.mxu0 0.0
        %533 = vmatpush1.msra.mxu0 0.0
        %534 = vmatprep.subr.mxu0 0.0
        %535 = vmatpush1.msra.mxu0 0.0
        %536 = vmatprep.subr.mxu0 0.0
        %537 = vmatpush1.msra.mxu0 0.0
        %538 = vmatprep.subr.mxu0 0.0
        %539 = vmatpush1.msra.mxu0 0.0
        %540 = vmatprep.subr.mxu0 0.0
        %541 = vmatpush1.msra.mxu0 0.0
        %542 = vmatprep.subr.mxu0 0.0
        %543 = vmatpush1.msra.mxu0 0.0
        %544 = vmatprep.subr.mxu0 0.0
        %545 = vmatpush1.msra.mxu0 0.0
        %546 = vmatprep.subr.mxu0 0.0
        %547 = vmatpush1.msra.mxu0 0.0
        %548 = vmatprep.subr.mxu0 0.0
        %549 = vmatpush1.msra.mxu0 0.0
        %550 = vmatprep.subr.mxu0 0.0
        %551 = vmatpush1.msra.mxu0 0.0
        %552 = vmatprep.subr.mxu0 0.0
        %553 = vmatpush1.msra.mxu0 0.0
        %554 = vmatprep.subr.mxu0 0.0
        %555 = vmatpush1.msra.mxu0 0.0
        %556 = vmatprep.subr.mxu0 0.0
        %557 = vmatpush1.msra.mxu0 0.0
        %558 = vmatprep.subr.mxu0 0.0
        %559 = vmatpush1.msra.mxu0 0.0
        %560 = vmatprep.subr.mxu0 0.0
        %561 = vmatpush1.msra.mxu0 0.0
        %562 = vmatprep.subr.mxu0 0.0
        %563 = vmatpush1.msra.mxu0 0.0
        %564 = vmatprep.subr.mxu0 0.0
        %565 = vmatpush1.msra.mxu0 0.0
        %566 = vmatprep.subr.mxu0 0.0
        %567 = vmatpush1.msra.mxu0 0.0
        %568 = vmatprep.subr.mxu0 0.0
        %569 = vmatpush1.msra.mxu0 0.0
        %570 = vmatprep.subr.mxu0 0.0
        %571 = vmatpush1.msra.mxu0 0.0
        %572 = vmatprep.subr.mxu0 0.0
        %573 = vmatpush1.msra.mxu0 0.0
        %574 = vmatprep.subr.mxu0 0.0
        %575 = vmatpush1.msra.mxu0 0.0
        %576 = vmatprep.mubr.f32.mxu0 0.0
        %577 = vmatmul.mubr.f32.gmra.mrb[0].mxu0 %v510
        %v578 = vpop.f32.mrb[0].mxu0
        %v579 = vadd.f32 0.0, %v578
        %v580 = vpop.f32.mrb[0].mxu0
        %v581 = vadd.f32 0.0, %v580
        %582 = vdwg.mxu0
        %v585 = vcombine.low %v579, %v581
        %587 = vst [vmem:[%s248] sm:$0xff] %v585
        %v588 = vcombine.low %v468, %v483
        %v590 = vunpack.c.l.s4 1966171168
        %v591 = vunpack.c.0.s8 %v590
        %v592 = vlaneseq
        %v593 = vshrl.u32 %v592, 7
        %v594 = vsub.s32 %v591, %v593
        %v595 = vrot.slane %v588, %v594
        %v597 = vunpack.c.l.s4 1966171168
        %v598 = vunpack.c.0.s8 %v597
        %v599 = vlaneseq
        %v600 = vshrl.u32 %v599, 7
        %v601 = vsub.s32 %v598, %v600
        %v602 = vrot.slane %v595, %v601
        %v603 = vlaneseq
        %vm604 = vcmp.ge.s32.totalorder %v603, 0
        %vm605 = vcmp.lt.s32.totalorder %v603, 256
        %vm606 = vmand %vm604, %vm605
        %607 = vst.msk [vmem:[%s255] sm:$0x3] %vm606, %v602
        %s608 = sand.u32 %s136, 1
        %s609 = scalar_lea.sflag [#allocation3], %s608
        %s610 = sand.u32 %s136, 1
        %s611 = smul.addr %s610, 8
        %s612 = scalar_lea.vmem [#allocation2], %s611
        %s613 = sand.u32 %s164, 1
        %s614 = scalar_lea.sflag [#allocation5], %s613
        %s615 = sand.u32 %s164, 1
        %s616 = smul.addr %s615, 2
        %s617 = scalar_lea.vmem [#allocation4], %s616
        // Predicated region
        $region37: #{tpu_custom_call.1} parent=35 // pred_check
          %p618 = pneg %p146
        $region38: #{tpu_custom_call.1} parent=35 // pred_check_branch
          %620 = sbr.rel (%p618) target = $region40
        $region39: #{tpu_custom_call.1} parent=35 // pred_region
          %s621 = smul.u32 2, %s28
          %s623 = ssub.s32 128, 128
          %624 = vsyncadd %s609, %s623
          %s625 = smul.addr %s27, 2
          %s626 = sadd.s32 %s621, %s625
          %s627 = smul.addr %s626, 64
          %s628 = scalar_lea.hbm %s4, %s627
          %s630 = sshll.u32 %s612, 4
          %s631 = int_to_ptr.vmem [resolvable:$true] %s630
          %633 = dma.vmem_to_hbm [thread:$0]  %s631, 128, %s628, %s609
        $region40: #{tpu_custom_call.1} parent=35 // pred_fallthru
          _
        // Predicated region
        $region41: #{tpu_custom_call.1} parent=35 // pred_check
          %p634 = pneg %p174
        $region42: #{tpu_custom_call.1} parent=35 // pred_check_branch
          %636 = sbr.rel (%p634) target = $region44
        $region43: #{tpu_custom_call.1} parent=35 // pred_region
          %s637 = smul.u32 2, %s28
          %s639 = ssub.s32 32, 32
          %640 = vsyncadd %s614, %s639
          %s641 = smul.addr %s27, 2
          %s642 = sadd.s32 %s637, %s641
          %s643 = smul.addr %s642, 16
          %s644 = scalar_lea.hbm %s5, %s643
          %s646 = sshll.u32 %s617, 4
          %s647 = int_to_ptr.vmem [resolvable:$true] %s646
          %649 = dma.vmem_to_hbm [thread:$0]  %s647, 32, %s644, %s614
        $region44: #{tpu_custom_call.1} parent=35 // pred_fallthru
          _
      $region36: #{tpu_custom_call.1} parent=5 // pred_fallthru
        _
      %p650 = scmp.le.s32.totalorder 2, %s18
      // Predicated region
      $region45: #{tpu_custom_call.1} parent=5 // pred_check
        %p651 = pneg %p650
      $region46: #{tpu_custom_call.1} parent=5 // pred_check_branch
        %653 = sbr.rel (%p651) target = $region48
      $region47: #{tpu_custom_call.1} parent=5 // pred_region
        %s654 = ssub.s32 %s18, 2
        // Predicated region
        $region49: #{tpu_custom_call.1} parent=47 // pred_check
          %p655 = pneg %p152
        $region50: #{tpu_custom_call.1} parent=47 // pred_check_branch
          %657 = sbr.rel (%p655) target = $region52
        $region51: #{tpu_custom_call.1} parent=47 // pred_region
          %s658 = sand.u32 %s137, 1
          %s659 = scalar_lea.sflag [#allocation3], %s658
          %s660 = sand.u32 %s137, 1
          %s661 = smul.addr %s660, 8
          %s662 = scalar_lea.vmem [#allocation2], %s661
          %663 = dma.done %s659, 128
        $region52: #{tpu_custom_call.1} parent=47 // pred_fallthru
          _
        // Predicated region
        $region53: #{tpu_custom_call.1} parent=47 // pred_check
          %p664 = pneg %p180
        $region54: #{tpu_custom_call.1} parent=47 // pred_check_branch
          %666 = sbr.rel (%p664) target = $region56
        $region55: #{tpu_custom_call.1} parent=47 // pred_region
          %s667 = sand.u32 %s165, 1
          %s668 = scalar_lea.sflag [#allocation5], %s667
          %s669 = sand.u32 %s165, 1
          %s670 = smul.addr %s669, 2
          %s671 = scalar_lea.vmem [#allocation4], %s670
          %672 = dma.done %s668, 32
        $region56: #{tpu_custom_call.1} parent=47 // pred_fallthru
          _
      $region48: #{tpu_custom_call.1} parent=5 // pred_fallthru
        _
    $region6: #{tpu_custom_call.1} parent=1 // loop_footer
      %s22 = sadd.s32 1, %s18
    $region7: #{tpu_custom_call.1} parent=1 // loop_footer_branch
      %17 = sbr.rel target = $region3
    $region8: #{tpu_custom_call.1} parent=1 // loop_exit
      _
    %673 = vsyncpa [#allocation3], 1
    %s674 = scalar_lea.sflag [#allocation3], 1
    %675 = vsyncpa %s674, 1
    %676 = vsyncpa [#allocation5], 1
    %s677 = scalar_lea.sflag [#allocation5], 1
    %678 = vsyncpa %s677, 1

</llo_original>
